<compile_context>
chip_gen: v7x
topology: tpu7x:2x2x1
jax: 0.10.0
libtpu: 0.0.40
codegen_flags: <defaults>
</compile_context>

<pallas_src>
import functools

import jax
import jax.numpy as jnp
from jax.experimental import pallas as pl
from jax.experimental.pallas import tpu as pltpu


def _lstm_seq_kernel(x_ref, h0_ref, c0_ref, wih_ref, whh_ref, b_ref,
                     wout_ref, bout_ref, y_ref, *,
                     seq_len, batch_pad, hidden):
    """Whole LSTM sequence + output Linear in a single kernel invocation.

    x_ref:    (T*Bp, I)     flattened (batch-padded) inputs
    h0_ref:   (Bp, H)       initial hidden state (padded rows zero)
    c0_ref:   (Bp, H)       initial cell state   (padded rows zero)
    wih_ref:  (I, 4H)       W_ih^T
    whh_ref:  (H, 4H)       W_hh^T
    b_ref:    (1, 4H)       b_ih + b_hh (pre-summed)
    wout_ref: (H, 128)      W_out^T zero-padded to 128 lanes
    bout_ref: (1, 128)      b_out zero-padded to 128 lanes
    y_ref:    (T*Bp, 128)   lane-dense output (real cols = [:I])
    """
    B, H = batch_pad, hidden

    # ---- Prologue: hoisted input projection for the entire sequence (one MXU
    # call) with the pre-summed LSTM biases folded in.
    xw = jnp.dot(x_ref[...], wih_ref[...],
                 preferred_element_type=jnp.float32) + b_ref[...]     # (T*Bp, 4H)

    whh = whh_ref[...]                                                # (H, 4H)
    h = h0_ref[...]                                                   # (Bp, H)
    c = c0_ref[...]                                                   # (Bp, H)

    # Lane mask selecting the g-gate block (lanes [2H, 3H)).
    lane = jax.lax.broadcasted_iota(jnp.int32, (B, 4 * H), 1)
    g_mask = (lane >= 2 * H) & (lane < 3 * H)

    # ---- Serial recurrence: only h @ W_hh^T + gate math on the critical path.
    # Statically unrolled (T is small); all slices below are compile-time ints
    # and, with Bp=8, sublane-tile aligned.
    hs = []
    for t in range(seq_len):
        gates = xw[t * B:(t + 1) * B, :] + jnp.dot(
            h, whh, preferred_element_type=jnp.float32)               # (Bp, 4H)

        # Single-tanh activations: sigmoid(x) = 0.5*(1 + tanh(x/2)); the g-gate
        # lanes pass straight through tanh. One EUP tanh over the full vreg.
        pre = jnp.where(g_mask, gates, 0.5 * gates)
        t_all = jnp.tanh(pre)
        act = jnp.where(g_mask, t_all, 0.5 * t_all + 0.5)

        i_g = act[:, 0 * H:1 * H]
        f_g = act[:, 1 * H:2 * H]
        g_g = act[:, 2 * H:3 * H]
        o_g = act[:, 3 * H:4 * H]

        c = f_g * c + i_g * g_g
        h = o_g * jnp.tanh(c)
        hs.append(h)

    # ---- Epilogue: hoisted output Linear, one matmul + one lane-dense store
    # for the whole sequence. Dropout(p=0) == identity.
    hs_all = jnp.concatenate(hs, axis=0)                              # (T*Bp, H)
    y = jnp.dot(hs_all, wout_ref[...],
                preferred_element_type=jnp.float32) + bout_ref[...]   # (T*Bp, 128)
    y_ref[...] = y.astype(y_ref.dtype)


def rnn_forward(x, h0, c0, w_ih, w_hh, b_ih, b_hh, w_out, b_out):
    """x: (T, B, I); h0/c0: (1, B, H); PyTorch-layout LSTM + Linear weights."""
    T, B, I = x.shape
    H = h0.shape[-1]

    B_pad = 8     # f32 sublane count: per-step tiles become aligned (8,*) blocks
    N_pad = 128   # lane-dense output width

    # Layout plumbing done once in the wrapper (cheap XLA ops, outside the kernel):
    x_p = jnp.zeros((T, B_pad, I), jnp.float32).at[:, :B, :].set(
        x.astype(jnp.float32))
    x2 = x_p.reshape(T * B_pad, I)                                    # (T*Bp, I)

    h0_p = jnp.zeros((B_pad, H), jnp.float32).at[:B, :].set(
        h0[0].astype(jnp.float32))
    c0_p = jnp.zeros((B_pad, H), jnp.float32).at[:B, :].set(
        c0[0].astype(jnp.float32))

    wih_t = jnp.asarray(w_ih.T, jnp.float32)                          # (I, 4H)
    whh_t = jnp.asarray(w_hh.T, jnp.float32)                          # (H, 4H)
    b2 = (b_ih + b_hh).reshape(1, 4 * H).astype(jnp.float32)          # (1, 4H)

    wout_p = jnp.zeros((H, N_pad), jnp.float32).at[:, :I].set(
        w_out.T.astype(jnp.float32))                                  # (H, 128)
    bout_p = jnp.zeros((1, N_pad), jnp.float32).at[:, :I].set(
        b_out.astype(jnp.float32))                                    # (1, 128)

    kernel = functools.partial(_lstm_seq_kernel,
                               seq_len=T, batch_pad=B_pad, hidden=H)

    vmem = pl.BlockSpec(memory_space=pltpu.MemorySpace.VMEM)
    y2 = pl.pallas_call(
        kernel,
        out_shape=jax.ShapeDtypeStruct((T * B_pad, N_pad), jnp.float32),
        in_specs=[vmem] * 8,
        out_specs=vmem,
        compiler_params=pltpu.CompilerParams(
            vmem_limit_bytes=32 * 1024 * 1024),
    )(x2, h0_p, c0_p, wih_t, whh_t, b2, wout_p, bout_p)

    # Strip the batch padding and the lane padding.
    return y2.reshape(T, B_pad, N_pad)[:, :B, :I]


def rnn_reference(x, h0, c0, w_ih, w_hh, b_ih, b_hh, w_out, b_out):
    """Pure-JAX reference (mirrors torch.nn.LSTM single layer + Linear)."""
    H = h0.shape[-1]

    def step(carry, x_t):
        h, c = carry
        gates = x_t @ w_ih.T + h @ w_hh.T + b_ih + b_hh
        i = jax.nn.sigmoid(gates[:, 0 * H:1 * H])
        f = jax.nn.sigmoid(gates[:, 1 * H:2 * H])
        g = jnp.tanh(gates[:, 2 * H:3 * H])
        o = jax.nn.sigmoid(gates[:, 3 * H:4 * H])
        c = f * c + i * g
        h = o * jnp.tanh(c)
        return (h, c), h

    (_, _), hs = jax.lax.scan(step, (h0[0], c0[0]), x)
    return hs @ w_out.T + b_out


if __name__ == "__main__":
    # Small shapes consistent with the module: seq=8, batch=2, input=16, hidden=32.
    T, B, I, H = 8, 2, 16, 32

    key = jax.random.PRNGKey(0)
    ks = jax.random.split(key, 9)
    bound = 1.0 / jnp.sqrt(H)

    x = jax.random.normal(ks[0], (T, B, I), jnp.float32)
    h0 = jax.random.normal(ks[1], (1, B, H), jnp.float32)
    c0 = jax.random.normal(ks[2], (1, B, H), jnp.float32)

    # PyTorch-shaped parameters (deterministic init, uniform(-1/sqrt(H), 1/sqrt(H)))
    w_ih = jax.random.uniform(ks[3], (4 * H, I), jnp.float32, -bound, bound)
    w_hh = jax.random.uniform(ks[4], (4 * H, H), jnp.float32, -bound, bound)
    b_ih = jax.random.uniform(ks[5], (4 * H,), jnp.float32, -bound, bound)
    b_hh = jax.random.uniform(ks[6], (4 * H,), jnp.float32, -bound, bound)
    w_out = jax.random.uniform(ks[7], (I, H), jnp.float32, -bound, bound)
    b_out = jax.random.uniform(ks[8], (I,), jnp.float32, -bound, bound)

    # TODO(synk): dropout>0 (training-mode RNG masking) not implemented; module
    # default p=0 -> identity, which is what is computed here.
    out = rnn_forward(x, h0, c0, w_ih, w_hh, b_ih, b_hh, w_out, b_out)
    out = jax.block_until_ready(out)

    ref = rnn_reference(x, h0, c0, w_ih, w_hh, b_ih, b_hh, w_out, b_out)
    assert out.shape == (T, B, I)
    assert jnp.allclose(out, ref, atol=1e-5, rtol=1e-5), "mismatch vs reference"

    print("KERNEL_OK")
</pallas_src>

<mosaic_0001>
module attributes {stable_mosaic.version = 11 : i64} {
  func.func @_lstm_seq_kernel(%arg0: memref<64x16xf32, #tpu.memory_space<vmem>>, %arg1: memref<8x32xf32, #tpu.memory_space<vmem>>, %arg2: memref<8x32xf32, #tpu.memory_space<vmem>>, %arg3: memref<16x128xf32, #tpu.memory_space<vmem>>, %arg4: memref<32x128xf32, #tpu.memory_space<vmem>>, %arg5: memref<1x128xf32, #tpu.memory_space<vmem>>, %arg6: memref<32x128xf32, #tpu.memory_space<vmem>>, %arg7: memref<1x128xf32, #tpu.memory_space<vmem>>, %arg8: memref<64x128xf32, #tpu.memory_space<vmem>>) attributes {dimension_semantics = [], scalar_prefetch = 0 : i64, scratch_operands = 0 : i64, tpu.core_type = #tpu.core_type<tc>} {
    %c0 = arith.constant 0 : index
    %c0_0 = arith.constant 0 : index
    %0 = vector.load %arg0[%c0, %c0_0] : memref<64x16xf32, #tpu.memory_space<vmem>>, vector<64x16xf32>
    %c0_1 = arith.constant 0 : index
    %c0_2 = arith.constant 0 : index
    %1 = vector.load %arg3[%c0_1, %c0_2] : memref<16x128xf32, #tpu.memory_space<vmem>>, vector<16x128xf32>
    %cst = arith.constant dense<0.000000e+00> : vector<64x128xf32>
    %2 = tpu.matmul %0, %1, %cst {dimension_numbers = #tpu.dot_dimension_numbers<[1], [0], [0], [1], [0, 0, 1, 1], [], []>} : vector<64x16xf32>, vector<16x128xf32>, vector<64x128xf32> -> vector<64x128xf32>
    %c0_3 = arith.constant 0 : index
    %c0_4 = arith.constant 0 : index
    %3 = vector.load %arg5[%c0_3, %c0_4] : memref<1x128xf32, #tpu.memory_space<vmem>>, vector<1x128xf32>
    %4 = vector.broadcast %3 : vector<1x128xf32> to vector<64x128xf32>
    %5 = arith.addf %2, %4 : vector<64x128xf32>
    %c0_5 = arith.constant 0 : index
    %c0_6 = arith.constant 0 : index
    %6 = vector.load %arg4[%c0_5, %c0_6] : memref<32x128xf32, #tpu.memory_space<vmem>>, vector<32x128xf32>
    %c0_7 = arith.constant 0 : index
    %c0_8 = arith.constant 0 : index
    %7 = vector.load %arg1[%c0_7, %c0_8] : memref<8x32xf32, #tpu.memory_space<vmem>>, vector<8x32xf32>
    %c0_9 = arith.constant 0 : index
    %c0_10 = arith.constant 0 : index
    %8 = vector.load %arg2[%c0_9, %c0_10] : memref<8x32xf32, #tpu.memory_space<vmem>>, vector<8x32xf32>
    %9 = tpu.iota {dimensions = array<i32: 1>} : vector<8x128xi32>
    %c64_i32 = arith.constant 64 : i32
    %10 = vector.broadcast %c64_i32 : i32 to vector<8x128xi32>
    %11 = arith.cmpi sge, %9, %10 : vector<8x128xi32>
    %c96_i32 = arith.constant 96 : i32
    %12 = vector.broadcast %c96_i32 : i32 to vector<8x128xi32>
    %13 = arith.cmpi slt, %9, %12 : vector<8x128xi32>
    %14 = arith.andi %11, %13 : vector<8x128xi1>
    %15 = vector.extract_strided_slice %5 {offsets = [0, 0], sizes = [8, 128], strides = [1, 1]} : vector<64x128xf32> to vector<8x128xf32>
    %cst_11 = arith.constant dense<0.000000e+00> : vector<8x128xf32>
    %16 = tpu.matmul %7, %6, %cst_11 {dimension_numbers = #tpu.dot_dimension_numbers<[1], [0], [0], [1], [0, 0, 1, 1], [], []>} : vector<8x32xf32>, vector<32x128xf32>, vector<8x128xf32> -> vector<8x128xf32>
    %17 = arith.addf %15, %16 : vector<8x128xf32>
    %cst_12 = arith.constant 5.000000e-01 : f32
    %18 = vector.broadcast %cst_12 : f32 to vector<8x128xf32>
    %19 = arith.mulf %18, %17 : vector<8x128xf32>
    %20 = arith.select %14, %17, %19 : vector<8x128xi1>, vector<8x128xf32>
    %21 = math.tanh %20 : vector<8x128xf32>
    %cst_13 = arith.constant 5.000000e-01 : f32
    %22 = vector.broadcast %cst_13 : f32 to vector<8x128xf32>
    %23 = arith.mulf %22, %21 : vector<8x128xf32>
    %cst_14 = arith.constant 5.000000e-01 : f32
    %24 = vector.broadcast %cst_14 : f32 to vector<8x128xf32>
    %25 = arith.addf %23, %24 : vector<8x128xf32>
    %26 = arith.select %14, %21, %25 : vector<8x128xi1>, vector<8x128xf32>
    %27 = vector.extract_strided_slice %26 {offsets = [0, 0], sizes = [8, 32], strides = [1, 1]} : vector<8x128xf32> to vector<8x32xf32>
    %28 = vector.extract_strided_slice %26 {offsets = [0, 32], sizes = [8, 32], strides = [1, 1]} : vector<8x128xf32> to vector<8x32xf32>
    %29 = vector.extract_strided_slice %26 {offsets = [0, 64], sizes = [8, 32], strides = [1, 1]} : vector<8x128xf32> to vector<8x32xf32>
    %30 = vector.extract_strided_slice %26 {offsets = [0, 96], sizes = [8, 32], strides = [1, 1]} : vector<8x128xf32> to vector<8x32xf32>
    %31 = arith.mulf %28, %8 : vector<8x32xf32>
    %32 = arith.mulf %27, %29 : vector<8x32xf32>
    %33 = arith.addf %31, %32 : vector<8x32xf32>
    %34 = math.tanh %33 : vector<8x32xf32>
    %35 = arith.mulf %30, %34 : vector<8x32xf32>
    %36 = vector.extract_strided_slice %5 {offsets = [8, 0], sizes = [8, 128], strides = [1, 1]} : vector<64x128xf32> to vector<8x128xf32>
    %cst_15 = arith.constant dense<0.000000e+00> : vector<8x128xf32>
    %37 = tpu.matmul %35, %6, %cst_15 {dimension_numbers = #tpu.dot_dimension_numbers<[1], [0], [0], [1], [0, 0, 1, 1], [], []>} : vector<8x32xf32>, vector<32x128xf32>, vector<8x128xf32> -> vector<8x128xf32>
    %38 = arith.addf %36, %37 : vector<8x128xf32>
    %cst_16 = arith.constant 5.000000e-01 : f32
    %39 = vector.broadcast %cst_16 : f32 to vector<8x128xf32>
    %40 = arith.mulf %39, %38 : vector<8x128xf32>
    %41 = arith.select %14, %38, %40 : vector<8x128xi1>, vector<8x128xf32>
    %42 = math.tanh %41 : vector<8x128xf32>
    %cst_17 = arith.constant 5.000000e-01 : f32
    %43 = vector.broadcast %cst_17 : f32 to vector<8x128xf32>
    %44 = arith.mulf %43, %42 : vector<8x128xf32>
    %cst_18 = arith.constant 5.000000e-01 : f32
    %45 = vector.broadcast %cst_18 : f32 to vector<8x128xf32>
    %46 = arith.addf %44, %45 : vector<8x128xf32>
    %47 = arith.select %14, %42, %46 : vector<8x128xi1>, vector<8x128xf32>
    %48 = vector.extract_strided_slice %47 {offsets = [0, 0], sizes = [8, 32], strides = [1, 1]} : vector<8x128xf32> to vector<8x32xf32>
    %49 = vector.extract_strided_slice %47 {offsets = [0, 32], sizes = [8, 32], strides = [1, 1]} : vector<8x128xf32> to vector<8x32xf32>
    %50 = vector.extract_strided_slice %47 {offsets = [0, 64], sizes = [8, 32], strides = [1, 1]} : vector<8x128xf32> to vector<8x32xf32>
    %51 = vector.extract_strided_slice %47 {offsets = [0, 96], sizes = [8, 32], strides = [1, 1]} : vector<8x128xf32> to vector<8x32xf32>
    %52 = arith.mulf %49, %33 : vector<8x32xf32>
    %53 = arith.mulf %48, %50 : vector<8x32xf32>
    %54 = arith.addf %52, %53 : vector<8x32xf32>
    %55 = math.tanh %54 : vector<8x32xf32>
    %56 = arith.mulf %51, %55 : vector<8x32xf32>
    %57 = vector.extract_strided_slice %5 {offsets = [16, 0], sizes = [8, 128], strides = [1, 1]} : vector<64x128xf32> to vector<8x128xf32>
    %cst_19 = arith.constant dense<0.000000e+00> : vector<8x128xf32>
    %58 = tpu.matmul %56, %6, %cst_19 {dimension_numbers = #tpu.dot_dimension_numbers<[1], [0], [0], [1], [0, 0, 1, 1], [], []>} : vector<8x32xf32>, vector<32x128xf32>, vector<8x128xf32> -> vector<8x128xf32>
    %59 = arith.addf %57, %58 : vector<8x128xf32>
    %cst_20 = arith.constant 5.000000e-01 : f32
    %60 = vector.broadcast %cst_20 : f32 to vector<8x128xf32>
    %61 = arith.mulf %60, %59 : vector<8x128xf32>
    %62 = arith.select %14, %59, %61 : vector<8x128xi1>, vector<8x128xf32>
    %63 = math.tanh %62 : vector<8x128xf32>
    %cst_21 = arith.constant 5.000000e-01 : f32
    %64 = vector.broadcast %cst_21 : f32 to vector<8x128xf32>
    %65 = arith.mulf %64, %63 : vector<8x128xf32>
    %cst_22 = arith.constant 5.000000e-01 : f32
    %66 = vector.broadcast %cst_22 : f32 to vector<8x128xf32>
    %67 = arith.addf %65, %66 : vector<8x128xf32>
    %68 = arith.select %14, %63, %67 : vector<8x128xi1>, vector<8x128xf32>
    %69 = vector.extract_strided_slice %68 {offsets = [0, 0], sizes = [8, 32], strides = [1, 1]} : vector<8x128xf32> to vector<8x32xf32>
    %70 = vector.extract_strided_slice %68 {offsets = [0, 32], sizes = [8, 32], strides = [1, 1]} : vector<8x128xf32> to vector<8x32xf32>
    %71 = vector.extract_strided_slice %68 {offsets = [0, 64], sizes = [8, 32], strides = [1, 1]} : vector<8x128xf32> to vector<8x32xf32>
    %72 = vector.extract_strided_slice %68 {offsets = [0, 96], sizes = [8, 32], strides = [1, 1]} : vector<8x128xf32> to vector<8x32xf32>
    %73 = arith.mulf %70, %54 : vector<8x32xf32>
    %74 = arith.mulf %69, %71 : vector<8x32xf32>
    %75 = arith.addf %73, %74 : vector<8x32xf32>
    %76 = math.tanh %75 : vector<8x32xf32>
    %77 = arith.mulf %72, %76 : vector<8x32xf32>
    %78 = vector.extract_strided_slice %5 {offsets = [24, 0], sizes = [8, 128], strides = [1, 1]} : vector<64x128xf32> to vector<8x128xf32>
    %cst_23 = arith.constant dense<0.000000e+00> : vector<8x128xf32>
    %79 = tpu.matmul %77, %6, %cst_23 {dimension_numbers = #tpu.dot_dimension_numbers<[1], [0], [0], [1], [0, 0, 1, 1], [], []>} : vector<8x32xf32>, vector<32x128xf32>, vector<8x128xf32> -> vector<8x128xf32>
    %80 = arith.addf %78, %79 : vector<8x128xf32>
    %cst_24 = arith.constant 5.000000e-01 : f32
    %81 = vector.broadcast %cst_24 : f32 to vector<8x128xf32>
    %82 = arith.mulf %81, %80 : vector<8x128xf32>
    %83 = arith.select %14, %80, %82 : vector<8x128xi1>, vector<8x128xf32>
    %84 = math.tanh %83 : vector<8x128xf32>
    %cst_25 = arith.constant 5.000000e-01 : f32
    %85 = vector.broadcast %cst_25 : f32 to vector<8x128xf32>
    %86 = arith.mulf %85, %84 : vector<8x128xf32>
    %cst_26 = arith.constant 5.000000e-01 : f32
    %87 = vector.broadcast %cst_26 : f32 to vector<8x128xf32>
    %88 = arith.addf %86, %87 : vector<8x128xf32>
    %89 = arith.select %14, %84, %88 : vector<8x128xi1>, vector<8x128xf32>
    %90 = vector.extract_strided_slice %89 {offsets = [0, 0], sizes = [8, 32], strides = [1, 1]} : vector<8x128xf32> to vector<8x32xf32>
    %91 = vector.extract_strided_slice %89 {offsets = [0, 32], sizes = [8, 32], strides = [1, 1]} : vector<8x128xf32> to vector<8x32xf32>
    %92 = vector.extract_strided_slice %89 {offsets = [0, 64], sizes = [8, 32], strides = [1, 1]} : vector<8x128xf32> to vector<8x32xf32>
    %93 = vector.extract_strided_slice %89 {offsets = [0, 96], sizes = [8, 32], strides = [1, 1]} : vector<8x128xf32> to vector<8x32xf32>
    %94 = arith.mulf %91, %75 : vector<8x32xf32>
    %95 = arith.mulf %90, %92 : vector<8x32xf32>
    %96 = arith.addf %94, %95 : vector<8x32xf32>
    %97 = math.tanh %96 : vector<8x32xf32>
    %98 = arith.mulf %93, %97 : vector<8x32xf32>
    %99 = vector.extract_strided_slice %5 {offsets = [32, 0], sizes = [8, 128], strides = [1, 1]} : vector<64x128xf32> to vector<8x128xf32>
    %cst_27 = arith.constant dense<0.000000e+00> : vector<8x128xf32>
    %100 = tpu.matmul %98, %6, %cst_27 {dimension_numbers = #tpu.dot_dimension_numbers<[1], [0], [0], [1], [0, 0, 1, 1], [], []>} : vector<8x32xf32>, vector<32x128xf32>, vector<8x128xf32> -> vector<8x128xf32>
    %101 = arith.addf %99, %100 : vector<8x128xf32>
    %cst_28 = arith.constant 5.000000e-01 : f32
    %102 = vector.broadcast %cst_28 : f32 to vector<8x128xf32>
    %103 = arith.mulf %102, %101 : vector<8x128xf32>
    %104 = arith.select %14, %101, %103 : vector<8x128xi1>, vector<8x128xf32>
    %105 = math.tanh %104 : vector<8x128xf32>
    %cst_29 = arith.constant 5.000000e-01 : f32
    %106 = vector.broadcast %cst_29 : f32 to vector<8x128xf32>
    %107 = arith.mulf %106, %105 : vector<8x128xf32>
    %cst_30 = arith.constant 5.000000e-01 : f32
    %108 = vector.broadcast %cst_30 : f32 to vector<8x128xf32>
    %109 = arith.addf %107, %108 : vector<8x128xf32>
    %110 = arith.select %14, %105, %109 : vector<8x128xi1>, vector<8x128xf32>
    %111 = vector.extract_strided_slice %110 {offsets = [0, 0], sizes = [8, 32], strides = [1, 1]} : vector<8x128xf32> to vector<8x32xf32>
    %112 = vector.extract_strided_slice %110 {offsets = [0, 32], sizes = [8, 32], strides = [1, 1]} : vector<8x128xf32> to vector<8x32xf32>
    %113 = vector.extract_strided_slice %110 {offsets = [0, 64], sizes = [8, 32], strides = [1, 1]} : vector<8x128xf32> to vector<8x32xf32>
    %114 = vector.extract_strided_slice %110 {offsets = [0, 96], sizes = [8, 32], strides = [1, 1]} : vector<8x128xf32> to vector<8x32xf32>
    %115 = arith.mulf %112, %96 : vector<8x32xf32>
    %116 = arith.mulf %111, %113 : vector<8x32xf32>
    %117 = arith.addf %115, %116 : vector<8x32xf32>
    %118 = math.tanh %117 : vector<8x32xf32>
    %119 = arith.mulf %114, %118 : vector<8x32xf32>
    %120 = vector.extract_strided_slice %5 {offsets = [40, 0], sizes = [8, 128], strides = [1, 1]} : vector<64x128xf32> to vector<8x128xf32>
    %cst_31 = arith.constant dense<0.000000e+00> : vector<8x128xf32>
    %121 = tpu.matmul %119, %6, %cst_31 {dimension_numbers = #tpu.dot_dimension_numbers<[1], [0], [0], [1], [0, 0, 1, 1], [], []>} : vector<8x32xf32>, vector<32x128xf32>, vector<8x128xf32> -> vector<8x128xf32>
    %122 = arith.addf %120, %121 : vector<8x128xf32>
    %cst_32 = arith.constant 5.000000e-01 : f32
    %123 = vector.broadcast %cst_32 : f32 to vector<8x128xf32>
    %124 = arith.mulf %123, %122 : vector<8x128xf32>
    %125 = arith.select %14, %122, %124 : vector<8x128xi1>, vector<8x128xf32>
    %126 = math.tanh %125 : vector<8x128xf32>
    %cst_33 = arith.constant 5.000000e-01 : f32
    %127 = vector.broadcast %cst_33 : f32 to vector<8x128xf32>
    %128 = arith.mulf %127, %126 : vector<8x128xf32>
    %cst_34 = arith.constant 5.000000e-01 : f32
    %129 = vector.broadcast %cst_34 : f32 to vector<8x128xf32>
    %130 = arith.addf %128, %129 : vector<8x128xf32>
    %131 = arith.select %14, %126, %130 : vector<8x128xi1>, vector<8x128xf32>
    %132 = vector.extract_strided_slice %131 {offsets = [0, 0], sizes = [8, 32], strides = [1, 1]} : vector<8x128xf32> to vector<8x32xf32>
    %133 = vector.extract_strided_slice %131 {offsets = [0, 32], sizes = [8, 32], strides = [1, 1]} : vector<8x128xf32> to vector<8x32xf32>
    %134 = vector.extract_strided_slice %131 {offsets = [0, 64], sizes = [8, 32], strides = [1, 1]} : vector<8x128xf32> to vector<8x32xf32>
    %135 = vector.extract_strided_slice %131 {offsets = [0, 96], sizes = [8, 32], strides = [1, 1]} : vector<8x128xf32> to vector<8x32xf32>
    %136 = arith.mulf %133, %117 : vector<8x32xf32>
    %137 = arith.mulf %132, %134 : vector<8x32xf32>
    %138 = arith.addf %136, %137 : vector<8x32xf32>
    %139 = math.tanh %138 : vector<8x32xf32>
    %140 = arith.mulf %135, %139 : vector<8x32xf32>
    %141 = vector.extract_strided_slice %5 {offsets = [48, 0], sizes = [8, 128], strides = [1, 1]} : vector<64x128xf32> to vector<8x128xf32>
    %cst_35 = arith.constant dense<0.000000e+00> : vector<8x128xf32>
    %142 = tpu.matmul %140, %6, %cst_35 {dimension_numbers = #tpu.dot_dimension_numbers<[1], [0], [0], [1], [0, 0, 1, 1], [], []>} : vector<8x32xf32>, vector<32x128xf32>, vector<8x128xf32> -> vector<8x128xf32>
    %143 = arith.addf %141, %142 : vector<8x128xf32>
    %cst_36 = arith.constant 5.000000e-01 : f32
    %144 = vector.broadcast %cst_36 : f32 to vector<8x128xf32>
    %145 = arith.mulf %144, %143 : vector<8x128xf32>
    %146 = arith.select %14, %143, %145 : vector<8x128xi1>, vector<8x128xf32>
    %147 = math.tanh %146 : vector<8x128xf32>
    %cst_37 = arith.constant 5.000000e-01 : f32
    %148 = vector.broadcast %cst_37 : f32 to vector<8x128xf32>
    %149 = arith.mulf %148, %147 : vector<8x128xf32>
    %cst_38 = arith.constant 5.000000e-01 : f32
    %150 = vector.broadcast %cst_38 : f32 to vector<8x128xf32>
    %151 = arith.addf %149, %150 : vector<8x128xf32>
    %152 = arith.select %14, %147, %151 : vector<8x128xi1>, vector<8x128xf32>
    %153 = vector.extract_strided_slice %152 {offsets = [0, 0], sizes = [8, 32], strides = [1, 1]} : vector<8x128xf32> to vector<8x32xf32>
    %154 = vector.extract_strided_slice %152 {offsets = [0, 32], sizes = [8, 32], strides = [1, 1]} : vector<8x128xf32> to vector<8x32xf32>
    %155 = vector.extract_strided_slice %152 {offsets = [0, 64], sizes = [8, 32], strides = [1, 1]} : vector<8x128xf32> to vector<8x32xf32>
    %156 = vector.extract_strided_slice %152 {offsets = [0, 96], sizes = [8, 32], strides = [1, 1]} : vector<8x128xf32> to vector<8x32xf32>
    %157 = arith.mulf %154, %138 : vector<8x32xf32>
    %158 = arith.mulf %153, %155 : vector<8x32xf32>
    %159 = arith.addf %157, %158 : vector<8x32xf32>
    %160 = math.tanh %159 : vector<8x32xf32>
    %161 = arith.mulf %156, %160 : vector<8x32xf32>
    %162 = vector.extract_strided_slice %5 {offsets = [56, 0], sizes = [8, 128], strides = [1, 1]} : vector<64x128xf32> to vector<8x128xf32>
    %cst_39 = arith.constant dense<0.000000e+00> : vector<8x128xf32>
    %163 = tpu.matmul %161, %6, %cst_39 {dimension_numbers = #tpu.dot_dimension_numbers<[1], [0], [0], [1], [0, 0, 1, 1], [], []>} : vector<8x32xf32>, vector<32x128xf32>, vector<8x128xf32> -> vector<8x128xf32>
    %164 = arith.addf %162, %163 : vector<8x128xf32>
    %cst_40 = arith.constant 5.000000e-01 : f32
    %165 = vector.broadcast %cst_40 : f32 to vector<8x128xf32>
    %166 = arith.mulf %165, %164 : vector<8x128xf32>
    %167 = arith.select %14, %164, %166 : vector<8x128xi1>, vector<8x128xf32>
    %168 = math.tanh %167 : vector<8x128xf32>
    %cst_41 = arith.constant 5.000000e-01 : f32
    %169 = vector.broadcast %cst_41 : f32 to vector<8x128xf32>
    %170 = arith.mulf %169, %168 : vector<8x128xf32>
    %cst_42 = arith.constant 5.000000e-01 : f32
    %171 = vector.broadcast %cst_42 : f32 to vector<8x128xf32>
    %172 = arith.addf %170, %171 : vector<8x128xf32>
    %173 = arith.select %14, %168, %172 : vector<8x128xi1>, vector<8x128xf32>
    %174 = vector.extract_strided_slice %173 {offsets = [0, 0], sizes = [8, 32], strides = [1, 1]} : vector<8x128xf32> to vector<8x32xf32>
    %175 = vector.extract_strided_slice %173 {offsets = [0, 32], sizes = [8, 32], strides = [1, 1]} : vector<8x128xf32> to vector<8x32xf32>
    %176 = vector.extract_strided_slice %173 {offsets = [0, 64], sizes = [8, 32], strides = [1, 1]} : vector<8x128xf32> to vector<8x32xf32>
    %177 = vector.extract_strided_slice %173 {offsets = [0, 96], sizes = [8, 32], strides = [1, 1]} : vector<8x128xf32> to vector<8x32xf32>
    %178 = arith.mulf %175, %159 : vector<8x32xf32>
    %179 = arith.mulf %174, %176 : vector<8x32xf32>
    %180 = arith.addf %178, %179 : vector<8x32xf32>
    %181 = math.tanh %180 : vector<8x32xf32>
    %182 = arith.mulf %177, %181 : vector<8x32xf32>
    %183 = tpu.concatenate %35, %56, %77, %98, %119, %140, %161, %182 in 0 : vector<8x32xf32>, vector<8x32xf32>, vector<8x32xf32>, vector<8x32xf32>, vector<8x32xf32>, vector<8x32xf32>, vector<8x32xf32>, vector<8x32xf32> -> vector<64x32xf32>
    %c0_43 = arith.constant 0 : index
    %c0_44 = arith.constant 0 : index
    %184 = vector.load %arg6[%c0_43, %c0_44] : memref<32x128xf32, #tpu.memory_space<vmem>>, vector<32x128xf32>
    %cst_45 = arith.constant dense<0.000000e+00> : vector<64x128xf32>
    %185 = tpu.matmul %183, %184, %cst_45 {dimension_numbers = #tpu.dot_dimension_numbers<[1], [0], [0], [1], [0, 0, 1, 1], [], []>} : vector<64x32xf32>, vector<32x128xf32>, vector<64x128xf32> -> vector<64x128xf32>
    %c0_46 = arith.constant 0 : index
    %c0_47 = arith.constant 0 : index
    %186 = vector.load %arg7[%c0_46, %c0_47] : memref<1x128xf32, #tpu.memory_space<vmem>>, vector<1x128xf32>
    %187 = vector.broadcast %186 : vector<1x128xf32> to vector<64x128xf32>
    %188 = arith.addf %185, %187 : vector<64x128xf32>
    %c0_48 = arith.constant 0 : index
    %c0_49 = arith.constant 0 : index
    %189 = vector.load %arg8[%c0_48, %c0_49] : memref<64x128xf32, #tpu.memory_space<vmem>>, vector<64x128xf32>
    tpu.vector_store %arg8[%c0_48, %c0_49], %188 {strides = array<i32>} : memref<64x128xf32, #tpu.memory_space<vmem>>, vector<64x128xf32>,
    return
  }
}

</mosaic_0001>

<llo_original>
// kernel: tpu_custom_call.1
$region0: #{tpu_custom_call.1}
  #allocation0 [shape = 'u32[]', space=smem, size = 0x4, offset = 0x4, fixed_abs, tag = 'smem constant byte address 0x4 - core index']
  #allocation1 [shape = 'u32[144,128]{1,0:T(1,128)}', space=vmem, size = 0x12000, scoped, tag = 'internal scratch']
  %s0 = inlined_call_operand.vmem [shape: f32[64,16], index: 0, kind: input, shape index: {}]
  %s1 = inlined_call_operand.hbm [shape: f32[8,32], index: 1, kind: input, shape index: {}]
  %s2 = inlined_call_operand.hbm [shape: f32[8,32], index: 2, kind: input, shape index: {}]
  %s3 = inlined_call_operand.vmem [shape: f32[16,128], index: 3, kind: input, shape index: {}]
  %s4 = inlined_call_operand.vmem [shape: f32[32,128], index: 4, kind: input, shape index: {}]
  %s5 = inlined_call_operand.vmem [shape: f32[1,128], index: 5, kind: input, shape index: {}]
  %s6 = inlined_call_operand.vmem [shape: f32[32,128], index: 6, kind: input, shape index: {}]
  %s7 = inlined_call_operand.vmem [shape: f32[1,128], index: 7, kind: input, shape index: {}]
  %s8 = inlined_call_operand.hbm [shape: f32[64,128], index: 8, kind: output, shape index: {}]
  %s9 = sld [smem:[#allocation0]]
  $region50: #{tpu_custom_call.1} parent=0
    _
  %s11 = ssub.s32 1, %s9
  %s12 = scalar_select 0, %s11, %s9
  $region1: #{tpu_custom_call.1} parent=0
    #allocation2 [shape = 'u8[4096]{0}', space=vmem, size = 0x1000, scoped, tag = 'input window, operand 1, single buffered']
    #allocation3 [shape = 's32[1]{0}', space=sflag, size = 0x4, scoped, tag = 'scoped memory for tpu_custom_call.1']
    #allocation4 [shape = 's32[1]{0}', space=sflag, size = 0x4, scoped, tag = 'scoped memory for tpu_custom_call.1']
    #allocation5 [shape = 'u8[4096]{0}', space=vmem, size = 0x1000, scoped, tag = 'input window, operand 2, single buffered']
    #allocation6 [shape = 's32[1]{0}', space=sflag, size = 0x4, scoped, tag = 'scoped memory for tpu_custom_call.1']
    #allocation7 [shape = 'u8[32768]{0}', space=vmem, size = 0x8000, scoped, tag = 'output window, operand 0, single buffered']
    %13 = vsyncpa [#allocation3], 0
    %14 = vsyncpa [#allocation6], 0
    %15 = vsyncpa [#allocation4], 0
    // Predicated region
    $region2: #{tpu_custom_call.1} parent=1 // pred_check
      _
    $region3: #{tpu_custom_call.1} parent=1 // pred_check_branch
      %17 = sbr.rel (0) target = $region5
    $region4: #{tpu_custom_call.1} parent=1 // pred_region
      _
    $region5: #{tpu_custom_call.1} parent=1 // pred_fallthru
      _
    // Predicated region
    $region6: #{tpu_custom_call.1} parent=1 // pred_check
      _
    $region7: #{tpu_custom_call.1} parent=1 // pred_check_branch
      %19 = sbr.rel (0) target = $region9
    $region8: #{tpu_custom_call.1} parent=1 // pred_region
      %s21 = ssub.s32 128, 128
      %22 = vsyncadd [#allocation3], %s21
      %s24 = sshll.u32 [#allocation2], 4
      %s25 = int_to_ptr.vmem [resolvable:$true] %s24
      %27 = dma.hbm_to_vmem [thread:$0]  %s1, 128, %s25, [#allocation3]
    $region9: #{tpu_custom_call.1} parent=1 // pred_fallthru
      _
    // Predicated region
    $region10: #{tpu_custom_call.1} parent=1 // pred_check
      _
    $region11: #{tpu_custom_call.1} parent=1 // pred_check_branch
      %29 = sbr.rel (0) target = $region13
    $region12: #{tpu_custom_call.1} parent=1 // pred_region
      %s31 = ssub.s32 128, 128
      %32 = vsyncadd [#allocation6], %s31
      %s34 = sshll.u32 [#allocation5], 4
      %s35 = int_to_ptr.vmem [resolvable:$true] %s34
      %37 = dma.hbm_to_vmem [thread:$0]  %s2, 128, %s35, [#allocation6]
    $region13: #{tpu_custom_call.1} parent=1 // pred_fallthru
      _
    // Predicated region
    $region14: #{tpu_custom_call.1} parent=1 // pred_check
      _
    $region15: #{tpu_custom_call.1} parent=1 // pred_check_branch
      %39 = sbr.rel (0) target = $region17
    $region16: #{tpu_custom_call.1} parent=1 // pred_region
      _
    $region17: #{tpu_custom_call.1} parent=1 // pred_fallthru
      _
    // Predicated region
    $region18: #{tpu_custom_call.1} parent=1 // pred_check
      _
    $region19: #{tpu_custom_call.1} parent=1 // pred_check_branch
      %41 = sbr.rel (0) target = $region21
    $region20: #{tpu_custom_call.1} parent=1 // pred_region
      _
    $region21: #{tpu_custom_call.1} parent=1 // pred_fallthru
      _
    // Predicated region
    $region22: #{tpu_custom_call.1} parent=1 // pred_check
      _
    $region23: #{tpu_custom_call.1} parent=1 // pred_check_branch
      %43 = sbr.rel (0) target = $region25
    $region24: #{tpu_custom_call.1} parent=1 // pred_region
      _
    $region25: #{tpu_custom_call.1} parent=1 // pred_fallthru
      _
    // Predicated region
    $region26: #{tpu_custom_call.1} parent=1 // pred_check
      _
    $region27: #{tpu_custom_call.1} parent=1 // pred_check_branch
      %45 = sbr.rel (0) target = $region29
    $region28: #{tpu_custom_call.1} parent=1 // pred_region
      _
    $region29: #{tpu_custom_call.1} parent=1 // pred_fallthru
      _
    // Predicated region
    $region30: #{tpu_custom_call.1} parent=1 // pred_check
      _
    $region31: #{tpu_custom_call.1} parent=1 // pred_check_branch
      %47 = sbr.rel (0) target = $region33
    $region32: #{tpu_custom_call.1} parent=1 // pred_region
      _
    $region33: #{tpu_custom_call.1} parent=1 // pred_fallthru
      _
    // Predicated region
    $region34: #{tpu_custom_call.1} parent=1 // pred_check
      _
    $region35: #{tpu_custom_call.1} parent=1 // pred_check_branch
      %49 = sbr.rel (0) target = $region37
    $region36: #{tpu_custom_call.1} parent=1 // pred_region
      %50 = dma.done [#allocation3], 128
    $region37: #{tpu_custom_call.1} parent=1 // pred_fallthru
      _
    // Predicated region
    $region38: #{tpu_custom_call.1} parent=1 // pred_check
      _
    $region39: #{tpu_custom_call.1} parent=1 // pred_check_branch
      %52 = sbr.rel (0) target = $region41
    $region40: #{tpu_custom_call.1} parent=1 // pred_region
      %53 = dma.done [#allocation6], 128
    $region41: #{tpu_custom_call.1} parent=1 // pred_fallthru
      _
    %v54 = vld [vmem:[%s0] sm:$0xff]
    %v55 = vld [vmem:[%s0 + $0x8] sm:$0xff]
    %v56 = vld [vmem:[%s0 + $0x10] sm:$0xff]
    %v57 = vld [vmem:[%s0 + $0x18] sm:$0xff]
    %v58 = vld [vmem:[%s0 + $0x20] sm:$0xff]
    %v59 = vld [vmem:[%s0 + $0x28] sm:$0xff]
    %v60 = vld [vmem:[%s0 + $0x30] sm:$0xff]
    %v61 = vld [vmem:[%s0 + $0x38] sm:$0xff]
    %v62 = vld [vmem:[%s3] sm:$0xff]
    %v63 = vld [vmem:[%s3 + $0x8] sm:$0xff]
    %v64 = vld [vmem:[%s5] sm:$0x1]
    %v66 = vlaneseq
    %v67 = vshrl.u32 %v66, 7
    %v68 = vsub.s32 0, %v67
    %v69 = vrot.slane %v64, %v68
    %vm71 = vcmask 130048
    %v73 = vsel %vm71, %v54, 0
    %v76 = vsel %vm71, %v55, 0
    %v79 = vsel %vm71, %v56, 0
    %v82 = vsel %vm71, %v57, 0
    %v85 = vsel %vm71, %v58, 0
    %v88 = vsel %vm71, %v59, 0
    %v91 = vsel %vm71, %v60, 0
    %v94 = vsel %vm71, %v61, 0
    %96 = vmatprep.subr.mxu0 0.0
    %97 = vmatpush1.msra.mxu0 %v62
    %98 = vmatprep.subr.mxu0 0.0
    %99 = vmatpush1.msra.mxu0 %v63
    %100 = vmatprep.subr.mxu0 0.0
    %101 = vmatpush1.msra.mxu0 0.0
    %102 = vmatprep.subr.mxu0 0.0
    %103 = vmatpush1.msra.mxu0 0.0
    %104 = vmatprep.subr.mxu0 0.0
    %105 = vmatpush1.msra.mxu0 0.0
    %106 = vmatprep.subr.mxu0 0.0
    %107 = vmatpush1.msra.mxu0 0.0
    %108 = vmatprep.subr.mxu0 0.0
    %109 = vmatpush1.msra.mxu0 0.0
    %110 = vmatprep.subr.mxu0 0.0
    %111 = vmatpush1.msra.mxu0 0.0
    %112 = vmatprep.subr.mxu0 0.0
    %113 = vmatpush1.msra.mxu0 0.0
    %114 = vmatprep.subr.mxu0 0.0
    %115 = vmatpush1.msra.mxu0 0.0
    %116 = vmatprep.subr.mxu0 0.0
    %117 = vmatpush1.msra.mxu0 0.0
    %118 = vmatprep.subr.mxu0 0.0
    %119 = vmatpush1.msra.mxu0 0.0
    %120 = vmatprep.subr.mxu0 0.0
    %121 = vmatpush1.msra.mxu0 0.0
    %122 = vmatprep.subr.mxu0 0.0
    %123 = vmatpush1.msra.mxu0 0.0
    %124 = vmatprep.subr.mxu0 0.0
    %125 = vmatpush1.msra.mxu0 0.0
    %126 = vmatprep.subr.mxu0 0.0
    %127 = vmatpush1.msra.mxu0 0.0
    %128 = vmatprep.subr.mxu0 0.0
    %129 = vmatpush1.msra.mxu0 0.0
    %130 = vmatprep.subr.mxu0 0.0
    %131 = vmatpush1.msra.mxu0 0.0
    %132 = vmatprep.subr.mxu0 0.0
    %133 = vmatpush1.msra.mxu0 0.0
    %134 = vmatprep.subr.mxu0 0.0
    %135 = vmatpush1.msra.mxu0 0.0
    %136 = vmatprep.subr.mxu0 0.0
    %137 = vmatpush1.msra.mxu0 0.0
    %138 = vmatprep.subr.mxu0 0.0
    %139 = vmatpush1.msra.mxu0 0.0
    %140 = vmatprep.subr.mxu0 0.0
    %141 = vmatpush1.msra.mxu0 0.0
    %142 = vmatprep.subr.mxu0 0.0
    %143 = vmatpush1.msra.mxu0 0.0
    %144 = vmatprep.subr.mxu0 0.0
    %145 = vmatpush1.msra.mxu0 0.0
    %146 = vmatprep.subr.mxu0 0.0
    %147 = vmatpush1.msra.mxu0 0.0
    %148 = vmatprep.subr.mxu0 0.0
    %149 = vmatpush1.msra.mxu0 0.0
    %150 = vmatprep.subr.mxu0 0.0
    %151 = vmatpush1.msra.mxu0 0.0
    %152 = vmatprep.subr.mxu0 0.0
    %153 = vmatpush1.msra.mxu0 0.0
    %154 = vmatprep.subr.mxu0 0.0
    %155 = vmatpush1.msra.mxu0 0.0
    %156 = vmatprep.subr.mxu0 0.0
    %157 = vmatpush1.msra.mxu0 0.0
    %158 = vmatprep.subr.mxu0 0.0
    %159 = vmatpush1.msra.mxu0 0.0
    %160 = vmatprep.mubr.f32.mxu0 0.0
    %161 = vmatmul.mubr.f32.gmra.mrb[0].mxu0 %v73
    %v162 = vpop.f32.mrb[0].mxu0
    %v163 = vadd.f32 %v69, %v162
    %v164 = vpop.f32.mrb[0].mxu0
    %165 = vmatprep.mubr.f32.mxu0 0.0
    %166 = vmatmul.mubr.f32.gmra.mrb[0].mxu0 %v76
    %v167 = vpop.f32.mrb[0].mxu0
    %v168 = vadd.f32 %v69, %v167
    %v169 = vpop.f32.mrb[0].mxu0
    %170 = vmatprep.mubr.f32.mxu0 0.0
    %171 = vmatmul.mubr.f32.gmra.mrb[0].mxu0 %v79
    %v172 = vpop.f32.mrb[0].mxu0
    %v173 = vadd.f32 %v69, %v172
    %v174 = vpop.f32.mrb[0].mxu0
    %175 = vmatprep.mubr.f32.mxu0 0.0
    %176 = vmatmul.mubr.f32.gmra.mrb[0].mxu0 %v82
    %v177 = vpop.f32.mrb[0].mxu0
    %v178 = vadd.f32 %v69, %v177
    %v179 = vpop.f32.mrb[0].mxu0
    %180 = vmatprep.mubr.f32.mxu0 0.0
    %181 = vmatmul.mubr.f32.gmra.mrb[0].mxu0 %v85
    %v182 = vpop.f32.mrb[0].mxu0
    %v183 = vadd.f32 %v69, %v182
    %v184 = vpop.f32.mrb[0].mxu0
    %185 = vmatprep.mubr.f32.mxu0 0.0
    %186 = vmatmul.mubr.f32.gmra.mrb[0].mxu0 %v88
    %v187 = vpop.f32.mrb[0].mxu0
    %v188 = vadd.f32 %v69, %v187
    %v189 = vpop.f32.mrb[0].mxu0
    %190 = vmatprep.mubr.f32.mxu0 0.0
    %191 = vmatmul.mubr.f32.gmra.mrb[0].mxu0 %v91
    %v192 = vpop.f32.mrb[0].mxu0
    %v193 = vadd.f32 %v69, %v192
    %v194 = vpop.f32.mrb[0].mxu0
    %195 = vmatprep.mubr.f32.mxu0 0.0
    %196 = vmatmul.mubr.f32.gmra.mrb[0].mxu0 %v94
    %v197 = vpop.f32.mrb[0].mxu0
    %v198 = vadd.f32 %v69, %v197
    %v199 = vpop.f32.mrb[0].mxu0
    %200 = vdwg.mxu0
    %v201 = vld [vmem:[%s4] sm:$0xff]
    %v202 = vld [vmem:[%s4 + $0x8] sm:$0xff]
    %v203 = vld [vmem:[%s4 + $0x10] sm:$0xff]
    %v204 = vld [vmem:[%s4 + $0x18] sm:$0xff]
    %v205 = vld [vmem:[#allocation2] sm:$0xff]
    %v206 = vld [vmem:[#allocation5] sm:$0xff]
    %v207 = vlaneseq
    %v208 = vand.u32 %v207, 127
    %vm209 = vcmp.ge.s32.totalorder %v208, 64
    %vm210 = vcmp.lt.s32.totalorder %v208, 96
    %vm211 = vmand %vm209, %vm210
    %vm212 = vcmask 261120
    %v214 = vsel %vm212, %v205, 0
    %216 = vmatprep.subr.mxu0 0.0
    %217 = vmatpush1.msra.mxu0 %v201
    %218 = vmatprep.subr.mxu0 0.0
    %219 = vmatpush1.msra.mxu0 %v202
    %220 = vmatprep.subr.mxu0 0.0
    %221 = vmatpush1.msra.mxu0 %v203
    %222 = vmatprep.subr.mxu0 0.0
    %223 = vmatpush1.msra.mxu0 %v204
    %224 = vmatprep.subr.mxu0 0.0
    %225 = vmatpush1.msra.mxu0 0.0
    %226 = vmatprep.subr.mxu0 0.0
    %227 = vmatpush1.msra.mxu0 0.0
    %228 = vmatprep.subr.mxu0 0.0
    %229 = vmatpush1.msra.mxu0 0.0
    %230 = vmatprep.subr.mxu0 0.0
    %231 = vmatpush1.msra.mxu0 0.0
    %232 = vmatprep.subr.mxu0 0.0
    %233 = vmatpush1.msra.mxu0 0.0
    %234 = vmatprep.subr.mxu0 0.0
    %235 = vmatpush1.msra.mxu0 0.0
    %236 = vmatprep.subr.mxu0 0.0
    %237 = vmatpush1.msra.mxu0 0.0
    %238 = vmatprep.subr.mxu0 0.0
    %239 = vmatpush1.msra.mxu0 0.0
    %240 = vmatprep.subr.mxu0 0.0
    %241 = vmatpush1.msra.mxu0 0.0
    %242 = vmatprep.subr.mxu0 0.0
    %243 = vmatpush1.msra.mxu0 0.0
    %244 = vmatprep.subr.mxu0 0.0
    %245 = vmatpush1.msra.mxu0 0.0
    %246 = vmatprep.subr.mxu0 0.0
    %247 = vmatpush1.msra.mxu0 0.0
    %248 = vmatprep.subr.mxu0 0.0
    %249 = vmatpush1.msra.mxu0 0.0
    %250 = vmatprep.subr.mxu0 0.0
    %251 = vmatpush1.msra.mxu0 0.0
    %252 = vmatprep.subr.mxu0 0.0
    %253 = vmatpush1.msra.mxu0 0.0
    %254 = vmatprep.subr.mxu0 0.0
    %255 = vmatpush1.msra.mxu0 0.0
    %256 = vmatprep.subr.mxu0 0.0
    %257 = vmatpush1.msra.mxu0 0.0
    %258 = vmatprep.subr.mxu0 0.0
    %259 = vmatpush1.msra.mxu0 0.0
    %260 = vmatprep.subr.mxu0 0.0
    %261 = vmatpush1.msra.mxu0 0.0
    %262 = vmatprep.subr.mxu0 0.0
    %263 = vmatpush1.msra.mxu0 0.0
    %264 = vmatprep.subr.mxu0 0.0
    %265 = vmatpush1.msra.mxu0 0.0
    %266 = vmatprep.subr.mxu0 0.0
    %267 = vmatpush1.msra.mxu0 0.0
    %268 = vmatprep.subr.mxu0 0.0
    %269 = vmatpush1.msra.mxu0 0.0
    %270 = vmatprep.subr.mxu0 0.0
    %271 = vmatpush1.msra.mxu0 0.0
    %272 = vmatprep.subr.mxu0 0.0
    %273 = vmatpush1.msra.mxu0 0.0
    %274 = vmatprep.subr.mxu0 0.0
    %275 = vmatpush1.msra.mxu0 0.0
    %276 = vmatprep.subr.mxu0 0.0
    %277 = vmatpush1.msra.mxu0 0.0
    %278 = vmatprep.subr.mxu0 0.0
    %279 = vmatpush1.msra.mxu0 0.0
    %280 = vmatprep.mubr.f32.mxu0 0.0
    %281 = vmatmul.mubr.f32.gmra.mrb[0].mxu0 %v214
    %v282 = vpop.f32.mrb[0].mxu0
    %v283 = vadd.f32 0.0, %v282
    %v284 = vpop.f32.mrb[0].mxu0
    %285 = vdwg.mxu0
    %v286 = vadd.f32 %v163, %v283
    %v287 = vmul.f32 %v286, 0.5
    %v288 = vsel %vm211, %v286, %v287
    %v289 = vtanh.pop %v288
    %v290 = vmul.f32 %v289, 0.5
    %v291 = vadd.f32 %v290, 0.5
    %v292 = vsel %vm211, %v289, %v291
    %294 = vrot.lane.b32.xlu0 %v206, 32
    %v295 = vpop.permute.xlu0 %294
    %v297 = vmul.f32 %v292, %v295
    %299 = vrot.lane.b32.xlu0 %v292, 64
    %v300 = vpop.permute.xlu0 %299
    %v302 = vmul.f32 %v292, %v300
    %304 = vrot.lane.b32.xlu0 %v302, 32
    %v305 = vpop.permute.xlu0 %304
    %v307 = vadd.f32 %v297, %v305
    %v308 = vtanh.pop %v307
    %310 = vrot.lane.b32.xlu0 %v308, 64
    %v311 = vpop.permute.xlu0 %310
    %v313 = vmul.f32 %v292, %v311
    %315 = vrot.lane.b32.xlu0 %v313, 32
    %v316 = vpop.permute.xlu0 %315
    %v317 = vsel %vm212, %v316, 0
    %319 = vmatprep.subr.mxu0 0.0
    %320 = vmatpush1.msra.mxu0 %v201
    %321 = vmatprep.subr.mxu0 0.0
    %322 = vmatpush1.msra.mxu0 %v202
    %323 = vmatprep.subr.mxu0 0.0
    %324 = vmatpush1.msra.mxu0 %v203
    %325 = vmatprep.subr.mxu0 0.0
    %326 = vmatpush1.msra.mxu0 %v204
    %327 = vmatprep.subr.mxu0 0.0
    %328 = vmatpush1.msra.mxu0 0.0
    %329 = vmatprep.subr.mxu0 0.0
    %330 = vmatpush1.msra.mxu0 0.0
    %331 = vmatprep.subr.mxu0 0.0
    %332 = vmatpush1.msra.mxu0 0.0
    %333 = vmatprep.subr.mxu0 0.0
    %334 = vmatpush1.msra.mxu0 0.0
    %335 = vmatprep.subr.mxu0 0.0
    %336 = vmatpush1.msra.mxu0 0.0
    %337 = vmatprep.subr.mxu0 0.0
    %338 = vmatpush1.msra.mxu0 0.0
    %339 = vmatprep.subr.mxu0 0.0
    %340 = vmatpush1.msra.mxu0 0.0
    %341 = vmatprep.subr.mxu0 0.0
    %342 = vmatpush1.msra.mxu0 0.0
    %343 = vmatprep.subr.mxu0 0.0
    %344 = vmatpush1.msra.mxu0 0.0
    %345 = vmatprep.subr.mxu0 0.0
    %346 = vmatpush1.msra.mxu0 0.0
    %347 = vmatprep.subr.mxu0 0.0
    %348 = vmatpush1.msra.mxu0 0.0
    %349 = vmatprep.subr.mxu0 0.0
    %350 = vmatpush1.msra.mxu0 0.0
    %351 = vmatprep.subr.mxu0 0.0
    %352 = vmatpush1.msra.mxu0 0.0
    %353 = vmatprep.subr.mxu0 0.0
    %354 = vmatpush1.msra.mxu0 0.0
    %355 = vmatprep.subr.mxu0 0.0
    %356 = vmatpush1.msra.mxu0 0.0
    %357 = vmatprep.subr.mxu0 0.0
    %358 = vmatpush1.msra.mxu0 0.0
    %359 = vmatprep.subr.mxu0 0.0
    %360 = vmatpush1.msra.mxu0 0.0
    %361 = vmatprep.subr.mxu0 0.0
    %362 = vmatpush1.msra.mxu0 0.0
    %363 = vmatprep.subr.mxu0 0.0
    %364 = vmatpush1.msra.mxu0 0.0
    %365 = vmatprep.subr.mxu0 0.0
    %366 = vmatpush1.msra.mxu0 0.0
    %367 = vmatprep.subr.mxu0 0.0
    %368 = vmatpush1.msra.mxu0 0.0
    %369 = vmatprep.subr.mxu0 0.0
    %370 = vmatpush1.msra.mxu0 0.0
    %371 = vmatprep.subr.mxu0 0.0
    %372 = vmatpush1.msra.mxu0 0.0
    %373 = vmatprep.subr.mxu0 0.0
    %374 = vmatpush1.msra.mxu0 0.0
    %375 = vmatprep.subr.mxu0 0.0
    %376 = vmatpush1.msra.mxu0 0.0
    %377 = vmatprep.subr.mxu0 0.0
    %378 = vmatpush1.msra.mxu0 0.0
    %379 = vmatprep.subr.mxu0 0.0
    %380 = vmatpush1.msra.mxu0 0.0
    %381 = vmatprep.subr.mxu0 0.0
    %382 = vmatpush1.msra.mxu0 0.0
    %383 = vmatprep.mubr.f32.mxu0 0.0
    %384 = vmatmul.mubr.f32.gmra.mrb[0].mxu0 %v317
    %v385 = vpop.f32.mrb[0].mxu0
    %v386 = vadd.f32 0.0, %v385
    %v387 = vpop.f32.mrb[0].mxu0
    %388 = vdwg.mxu0
    %v389 = vadd.f32 %v168, %v386
    %v390 = vmul.f32 %v389, 0.5
    %v391 = vsel %vm211, %v389, %v390
    %v392 = vtanh.pop %v391
    %v393 = vmul.f32 %v392, 0.5
    %v394 = vadd.f32 %v393, 0.5
    %v395 = vsel %vm211, %v392, %v394
    %v396 = vmul.f32 %v395, %v307
    %398 = vrot.lane.b32.xlu0 %v395, 64
    %v399 = vpop.permute.xlu0 %398
    %v401 = vmul.f32 %v395, %v399
    %403 = vrot.lane.b32.xlu0 %v401, 32
    %v404 = vpop.permute.xlu0 %403
    %v406 = vadd.f32 %v396, %v404
    %v407 = vtanh.pop %v406
    %409 = vrot.lane.b32.xlu0 %v407, 64
    %v410 = vpop.permute.xlu0 %409
    %v412 = vmul.f32 %v395, %v410
    %414 = vrot.lane.b32.xlu0 %v412, 32
    %v415 = vpop.permute.xlu0 %414
    %v416 = vsel %vm212, %v415, 0
    %418 = vmatprep.subr.mxu0 0.0
    %419 = vmatpush1.msra.mxu0 %v201
    %420 = vmatprep.subr.mxu0 0.0
    %421 = vmatpush1.msra.mxu0 %v202
    %422 = vmatprep.subr.mxu0 0.0
    %423 = vmatpush1.msra.mxu0 %v203
    %424 = vmatprep.subr.mxu0 0.0
    %425 = vmatpush1.msra.mxu0 %v204
    %426 = vmatprep.subr.mxu0 0.0
    %427 = vmatpush1.msra.mxu0 0.0
    %428 = vmatprep.subr.mxu0 0.0
    %429 = vmatpush1.msra.mxu0 0.0
    %430 = vmatprep.subr.mxu0 0.0
    %431 = vmatpush1.msra.mxu0 0.0
    %432 = vmatprep.subr.mxu0 0.0
    %433 = vmatpush1.msra.mxu0 0.0
    %434 = vmatprep.subr.mxu0 0.0
    %435 = vmatpush1.msra.mxu0 0.0
    %436 = vmatprep.subr.mxu0 0.0
    %437 = vmatpush1.msra.mxu0 0.0
    %438 = vmatprep.subr.mxu0 0.0
    %439 = vmatpush1.msra.mxu0 0.0
    %440 = vmatprep.subr.mxu0 0.0
    %441 = vmatpush1.msra.mxu0 0.0
    %442 = vmatprep.subr.mxu0 0.0
    %443 = vmatpush1.msra.mxu0 0.0
    %444 = vmatprep.subr.mxu0 0.0
    %445 = vmatpush1.msra.mxu0 0.0
    %446 = vmatprep.subr.mxu0 0.0
    %447 = vmatpush1.msra.mxu0 0.0
    %448 = vmatprep.subr.mxu0 0.0
    %449 = vmatpush1.msra.mxu0 0.0
    %450 = vmatprep.subr.mxu0 0.0
    %451 = vmatpush1.msra.mxu0 0.0
    %452 = vmatprep.subr.mxu0 0.0
    %453 = vmatpush1.msra.mxu0 0.0
    %454 = vmatprep.subr.mxu0 0.0
    %455 = vmatpush1.msra.mxu0 0.0
    %456 = vmatprep.subr.mxu0 0.0
    %457 = vmatpush1.msra.mxu0 0.0
    %458 = vmatprep.subr.mxu0 0.0
    %459 = vmatpush1.msra.mxu0 0.0
    %460 = vmatprep.subr.mxu0 0.0
    %461 = vmatpush1.msra.mxu0 0.0
    %462 = vmatprep.subr.mxu0 0.0
    %463 = vmatpush1.msra.mxu0 0.0
    %464 = vmatprep.subr.mxu0 0.0
    %465 = vmatpush1.msra.mxu0 0.0
    %466 = vmatprep.subr.mxu0 0.0
    %467 = vmatpush1.msra.mxu0 0.0
    %468 = vmatprep.subr.mxu0 0.0
    %469 = vmatpush1.msra.mxu0 0.0
    %470 = vmatprep.subr.mxu0 0.0
    %471 = vmatpush1.msra.mxu0 0.0
    %472 = vmatprep.subr.mxu0 0.0
    %473 = vmatpush1.msra.mxu0 0.0
    %474 = vmatprep.subr.mxu0 0.0
    %475 = vmatpush1.msra.mxu0 0.0
    %476 = vmatprep.subr.mxu0 0.0
    %477 = vmatpush1.msra.mxu0 0.0
    %478 = vmatprep.subr.mxu0 0.0
    %479 = vmatpush1.msra.mxu0 0.0
    %480 = vmatprep.subr.mxu0 0.0
    %481 = vmatpush1.msra.mxu0 0.0
    %482 = vmatprep.mubr.f32.mxu0 0.0
    %483 = vmatmul.mubr.f32.gmra.mrb[0].mxu0 %v416
    %v484 = vpop.f32.mrb[0].mxu0
    %v485 = vadd.f32 0.0, %v484
    %v486 = vpop.f32.mrb[0].mxu0
    %487 = vdwg.mxu0
    %v488 = vadd.f32 %v173, %v485
    %v489 = vmul.f32 %v488, 0.5
    %v490 = vsel %vm211, %v488, %v489
    %v491 = vtanh.pop %v490
    %v492 = vmul.f32 %v491, 0.5
    %v493 = vadd.f32 %v492, 0.5
    %v494 = vsel %vm211, %v491, %v493
    %v495 = vmul.f32 %v494, %v406
    %497 = vrot.lane.b32.xlu0 %v494, 64
    %v498 = vpop.permute.xlu0 %497
    %v500 = vmul.f32 %v494, %v498
    %502 = vrot.lane.b32.xlu0 %v500, 32
    %v503 = vpop.permute.xlu0 %502
    %v505 = vadd.f32 %v495, %v503
    %v506 = vtanh.pop %v505
    %508 = vrot.lane.b32.xlu0 %v506, 64
    %v509 = vpop.permute.xlu0 %508
    %v511 = vmul.f32 %v494, %v509
    %513 = vrot.lane.b32.xlu0 %v511, 32
    %v514 = vpop.permute.xlu0 %513
    %v515 = vsel %vm212, %v514, 0
    %517 = vmatprep.subr.mxu0 0.0
    %518 = vmatpush1.msra.mxu0 %v201
    %519 = vmatprep.subr.mxu0 0.0
    %520 = vmatpush1.msra.mxu0 %v202
    %521 = vmatprep.subr.mxu0 0.0
    %522 = vmatpush1.msra.mxu0 %v203
    %523 = vmatprep.subr.mxu0 0.0
    %524 = vmatpush1.msra.mxu0 %v204
    %525 = vmatprep.subr.mxu0 0.0
    %526 = vmatpush1.msra.mxu0 0.0
    %527 = vmatprep.subr.mxu0 0.0
    %528 = vmatpush1.msra.mxu0 0.0
    %529 = vmatprep.subr.mxu0 0.0
    %530 = vmatpush1.msra.mxu0 0.0
    %531 = vmatprep.subr.mxu0 0.0
    %532 = vmatpush1.msra.mxu0 0.0
    %533 = vmatprep.subr.mxu0 0.0
    %534 = vmatpush1.msra.mxu0 0.0
    %535 = vmatprep.subr.mxu0 0.0
    %536 = vmatpush1.msra.mxu0 0.0
    %537 = vmatprep.subr.mxu0 0.0
    %538 = vmatpush1.msra.mxu0 0.0
    %539 = vmatprep.subr.mxu0 0.0
    %540 = vmatpush1.msra.mxu0 0.0
    %541 = vmatprep.subr.mxu0 0.0
    %542 = vmatpush1.msra.mxu0 0.0
    %543 = vmatprep.subr.mxu0 0.0
    %544 = vmatpush1.msra.mxu0 0.0
    %545 = vmatprep.subr.mxu0 0.0
    %546 = vmatpush1.msra.mxu0 0.0
    %547 = vmatprep.subr.mxu0 0.0
    %548 = vmatpush1.msra.mxu0 0.0
    %549 = vmatprep.subr.mxu0 0.0
    %550 = vmatpush1.msra.mxu0 0.0
    %551 = vmatprep.subr.mxu0 0.0
    %552 = vmatpush1.msra.mxu0 0.0
    %553 = vmatprep.subr.mxu0 0.0
    %554 = vmatpush1.msra.mxu0 0.0
    %555 = vmatprep.subr.mxu0 0.0
    %556 = vmatpush1.msra.mxu0 0.0
    %557 = vmatprep.subr.mxu0 0.0
    %558 = vmatpush1.msra.mxu0 0.0
    %559 = vmatprep.subr.mxu0 0.0
    %560 = vmatpush1.msra.mxu0 0.0
    %561 = vmatprep.subr.mxu0 0.0
    %562 = vmatpush1.msra.mxu0 0.0
    %563 = vmatprep.subr.mxu0 0.0
    %564 = vmatpush1.msra.mxu0 0.0
    %565 = vmatprep.subr.mxu0 0.0
    %566 = vmatpush1.msra.mxu0 0.0
    %567 = vmatprep.subr.mxu0 0.0
    %568 = vmatpush1.msra.mxu0 0.0
    %569 = vmatprep.subr.mxu0 0.0
    %570 = vmatpush1.msra.mxu0 0.0
    %571 = vmatprep.subr.mxu0 0.0
    %572 = vmatpush1.msra.mxu0 0.0
    %573 = vmatprep.subr.mxu0 0.0
    %574 = vmatpush1.msra.mxu0 0.0
    %575 = vmatprep.subr.mxu0 0.0
    %576 = vmatpush1.msra.mxu0 0.0
    %577 = vmatprep.subr.mxu0 0.0
    %578 = vmatpush1.msra.mxu0 0.0
    %579 = vmatprep.subr.mxu0 0.0
    %580 = vmatpush1.msra.mxu0 0.0
    %581 = vmatprep.mubr.f32.mxu0 0.0
    %582 = vmatmul.mubr.f32.gmra.mrb[0].mxu0 %v515
    %v583 = vpop.f32.mrb[0].mxu0
    %v584 = vadd.f32 0.0, %v583
    %v585 = vpop.f32.mrb[0].mxu0
    %586 = vdwg.mxu0
    %v587 = vadd.f32 %v178, %v584
    %v588 = vmul.f32 %v587, 0.5
    %v589 = vsel %vm211, %v587, %v588
    %v590 = vtanh.pop %v589
    %v591 = vmul.f32 %v590, 0.5
    %v592 = vadd.f32 %v591, 0.5
    %v593 = vsel %vm211, %v590, %v592
    %v594 = vmul.f32 %v593, %v505
    %596 = vrot.lane.b32.xlu0 %v593, 64
    %v597 = vpop.permute.xlu0 %596
    %v599 = vmul.f32 %v593, %v597
    %601 = vrot.lane.b32.xlu0 %v599, 32
    %v602 = vpop.permute.xlu0 %601
    %v604 = vadd.f32 %v594, %v602
    %v605 = vtanh.pop %v604
    %607 = vrot.lane.b32.xlu0 %v605, 64
    %v608 = vpop.permute.xlu0 %607
    %v610 = vmul.f32 %v593, %v608
    %612 = vrot.lane.b32.xlu0 %v610, 32
    %v613 = vpop.permute.xlu0 %612
    %v614 = vsel %vm212, %v613, 0
    %616 = vmatprep.subr.mxu0 0.0
    %617 = vmatpush1.msra.mxu0 %v201
    %618 = vmatprep.subr.mxu0 0.0
    %619 = vmatpush1.msra.mxu0 %v202
    %620 = vmatprep.subr.mxu0 0.0
    %621 = vmatpush1.msra.mxu0 %v203
    %622 = vmatprep.subr.mxu0 0.0
    %623 = vmatpush1.msra.mxu0 %v204
    %624 = vmatprep.subr.mxu0 0.0
    %625 = vmatpush1.msra.mxu0 0.0
    %626 = vmatprep.subr.mxu0 0.0
    %627 = vmatpush1.msra.mxu0 0.0
    %628 = vmatprep.subr.mxu0 0.0
    %629 = vmatpush1.msra.mxu0 0.0
    %630 = vmatprep.subr.mxu0 0.0
    %631 = vmatpush1.msra.mxu0 0.0
    %632 = vmatprep.subr.mxu0 0.0
    %633 = vmatpush1.msra.mxu0 0.0
    %634 = vmatprep.subr.mxu0 0.0
    %635 = vmatpush1.msra.mxu0 0.0
    %636 = vmatprep.subr.mxu0 0.0
    %637 = vmatpush1.msra.mxu0 0.0
    %638 = vmatprep.subr.mxu0 0.0
    %639 = vmatpush1.msra.mxu0 0.0
    %640 = vmatprep.subr.mxu0 0.0
    %641 = vmatpush1.msra.mxu0 0.0
    %642 = vmatprep.subr.mxu0 0.0
    %643 = vmatpush1.msra.mxu0 0.0
    %644 = vmatprep.subr.mxu0 0.0
    %645 = vmatpush1.msra.mxu0 0.0
    %646 = vmatprep.subr.mxu0 0.0
    %647 = vmatpush1.msra.mxu0 0.0
    %648 = vmatprep.subr.mxu0 0.0
    %649 = vmatpush1.msra.mxu0 0.0
    %650 = vmatprep.subr.mxu0 0.0
    %651 = vmatpush1.msra.mxu0 0.0
    %652 = vmatprep.subr.mxu0 0.0
    %653 = vmatpush1.msra.mxu0 0.0
    %654 = vmatprep.subr.mxu0 0.0
    %655 = vmatpush1.msra.mxu0 0.0
    %656 = vmatprep.subr.mxu0 0.0
    %657 = vmatpush1.msra.mxu0 0.0
    %658 = vmatprep.subr.mxu0 0.0
    %659 = vmatpush1.msra.mxu0 0.0
    %660 = vmatprep.subr.mxu0 0.0
    %661 = vmatpush1.msra.mxu0 0.0
    %662 = vmatprep.subr.mxu0 0.0
    %663 = vmatpush1.msra.mxu0 0.0
    %664 = vmatprep.subr.mxu0 0.0
    %665 = vmatpush1.msra.mxu0 0.0
    %666 = vmatprep.subr.mxu0 0.0
    %667 = vmatpush1.msra.mxu0 0.0
    %668 = vmatprep.subr.mxu0 0.0
    %669 = vmatpush1.msra.mxu0 0.0
    %670 = vmatprep.subr.mxu0 0.0
    %671 = vmatpush1.msra.mxu0 0.0
    %672 = vmatprep.subr.mxu0 0.0
    %673 = vmatpush1.msra.mxu0 0.0
    %674 = vmatprep.subr.mxu0 0.0
    %675 = vmatpush1.msra.mxu0 0.0
    %676 = vmatprep.subr.mxu0 0.0
    %677 = vmatpush1.msra.mxu0 0.0
    %678 = vmatprep.subr.mxu0 0.0
    %679 = vmatpush1.msra.mxu0 0.0
    %680 = vmatprep.mubr.f32.mxu0 0.0
    %681 = vmatmul.mubr.f32.gmra.mrb[0].mxu0 %v614
    %v682 = vpop.f32.mrb[0].mxu0
    %v683 = vadd.f32 0.0, %v682
    %v684 = vpop.f32.mrb[0].mxu0
    %685 = vdwg.mxu0
    %v686 = vadd.f32 %v183, %v683
    %v687 = vmul.f32 %v686, 0.5
    %v688 = vsel %vm211, %v686, %v687
    %v689 = vtanh.pop %v688
    %v690 = vmul.f32 %v689, 0.5
    %v691 = vadd.f32 %v690, 0.5
    %v692 = vsel %vm211, %v689, %v691
    %v693 = vmul.f32 %v692, %v604
    %695 = vrot.lane.b32.xlu0 %v692, 64
    %v696 = vpop.permute.xlu0 %695
    %v698 = vmul.f32 %v692, %v696
    %700 = vrot.lane.b32.xlu0 %v698, 32
    %v701 = vpop.permute.xlu0 %700
    %v703 = vadd.f32 %v693, %v701
    %v704 = vtanh.pop %v703
    %706 = vrot.lane.b32.xlu0 %v704, 64
    %v707 = vpop.permute.xlu0 %706
    %v709 = vmul.f32 %v692, %v707
    %711 = vrot.lane.b32.xlu0 %v709, 32
    %v712 = vpop.permute.xlu0 %711
    %v713 = vsel %vm212, %v712, 0
    %715 = vmatprep.subr.mxu0 0.0
    %716 = vmatpush1.msra.mxu0 %v201
    %717 = vmatprep.subr.mxu0 0.0
    %718 = vmatpush1.msra.mxu0 %v202
    %719 = vmatprep.subr.mxu0 0.0
    %720 = vmatpush1.msra.mxu0 %v203
    %721 = vmatprep.subr.mxu0 0.0
    %722 = vmatpush1.msra.mxu0 %v204
    %723 = vmatprep.subr.mxu0 0.0
    %724 = vmatpush1.msra.mxu0 0.0
    %725 = vmatprep.subr.mxu0 0.0
    %726 = vmatpush1.msra.mxu0 0.0
    %727 = vmatprep.subr.mxu0 0.0
    %728 = vmatpush1.msra.mxu0 0.0
    %729 = vmatprep.subr.mxu0 0.0
    %730 = vmatpush1.msra.mxu0 0.0
    %731 = vmatprep.subr.mxu0 0.0
    %732 = vmatpush1.msra.mxu0 0.0
    %733 = vmatprep.subr.mxu0 0.0
    %734 = vmatpush1.msra.mxu0 0.0
    %735 = vmatprep.subr.mxu0 0.0
    %736 = vmatpush1.msra.mxu0 0.0
    %737 = vmatprep.subr.mxu0 0.0
    %738 = vmatpush1.msra.mxu0 0.0
    %739 = vmatprep.subr.mxu0 0.0
    %740 = vmatpush1.msra.mxu0 0.0
    %741 = vmatprep.subr.mxu0 0.0
    %742 = vmatpush1.msra.mxu0 0.0
    %743 = vmatprep.subr.mxu0 0.0
    %744 = vmatpush1.msra.mxu0 0.0
    %745 = vmatprep.subr.mxu0 0.0
    %746 = vmatpush1.msra.mxu0 0.0
    %747 = vmatprep.subr.mxu0 0.0
    %748 = vmatpush1.msra.mxu0 0.0
    %749 = vmatprep.subr.mxu0 0.0
    %750 = vmatpush1.msra.mxu0 0.0
    %751 = vmatprep.subr.mxu0 0.0
    %752 = vmatpush1.msra.mxu0 0.0
    %753 = vmatprep.subr.mxu0 0.0
    %754 = vmatpush1.msra.mxu0 0.0
    %755 = vmatprep.subr.mxu0 0.0
    %756 = vmatpush1.msra.mxu0 0.0
    %757 = vmatprep.subr.mxu0 0.0
    %758 = vmatpush1.msra.mxu0 0.0
    %759 = vmatprep.subr.mxu0 0.0
    %760 = vmatpush1.msra.mxu0 0.0
    %761 = vmatprep.subr.mxu0 0.0
    %762 = vmatpush1.msra.mxu0 0.0
    %763 = vmatprep.subr.mxu0 0.0
    %764 = vmatpush1.msra.mxu0 0.0
    %765 = vmatprep.subr.mxu0 0.0
    %766 = vmatpush1.msra.mxu0 0.0
    %767 = vmatprep.subr.mxu0 0.0
    %768 = vmatpush1.msra.mxu0 0.0
    %769 = vmatprep.subr.mxu0 0.0
    %770 = vmatpush1.msra.mxu0 0.0
    %771 = vmatprep.subr.mxu0 0.0
    %772 = vmatpush1.msra.mxu0 0.0
    %773 = vmatprep.subr.mxu0 0.0
    %774 = vmatpush1.msra.mxu0 0.0
    %775 = vmatprep.subr.mxu0 0.0
    %776 = vmatpush1.msra.mxu0 0.0
    %777 = vmatprep.subr.mxu0 0.0
    %778 = vmatpush1.msra.mxu0 0.0
    %779 = vmatprep.mubr.f32.mxu0 0.0
    %780 = vmatmul.mubr.f32.gmra.mrb[0].mxu0 %v713
    %v781 = vpop.f32.mrb[0].mxu0
    %v782 = vadd.f32 0.0, %v781
    %v783 = vpop.f32.mrb[0].mxu0
    %784 = vdwg.mxu0
    %v785 = vadd.f32 %v188, %v782
    %v786 = vmul.f32 %v785, 0.5
    %v787 = vsel %vm211, %v785, %v786
    %v788 = vtanh.pop %v787
    %v789 = vmul.f32 %v788, 0.5
    %v790 = vadd.f32 %v789, 0.5
    %v791 = vsel %vm211, %v788, %v790
    %v792 = vmul.f32 %v791, %v703
    %794 = vrot.lane.b32.xlu0 %v791, 64
    %v795 = vpop.permute.xlu0 %794
    %v797 = vmul.f32 %v791, %v795
    %799 = vrot.lane.b32.xlu0 %v797, 32
    %v800 = vpop.permute.xlu0 %799
    %v802 = vadd.f32 %v792, %v800
    %v803 = vtanh.pop %v802
    %805 = vrot.lane.b32.xlu0 %v803, 64
    %v806 = vpop.permute.xlu0 %805
    %v808 = vmul.f32 %v791, %v806
    %810 = vrot.lane.b32.xlu0 %v808, 32
    %v811 = vpop.permute.xlu0 %810
    %v812 = vsel %vm212, %v811, 0
    %814 = vmatprep.subr.mxu0 0.0
    %815 = vmatpush1.msra.mxu0 %v201
    %816 = vmatprep.subr.mxu0 0.0
    %817 = vmatpush1.msra.mxu0 %v202
    %818 = vmatprep.subr.mxu0 0.0
    %819 = vmatpush1.msra.mxu0 %v203
    %820 = vmatprep.subr.mxu0 0.0
    %821 = vmatpush1.msra.mxu0 %v204
    %822 = vmatprep.subr.mxu0 0.0
    %823 = vmatpush1.msra.mxu0 0.0
    %824 = vmatprep.subr.mxu0 0.0
    %825 = vmatpush1.msra.mxu0 0.0
    %826 = vmatprep.subr.mxu0 0.0
    %827 = vmatpush1.msra.mxu0 0.0
    %828 = vmatprep.subr.mxu0 0.0
    %829 = vmatpush1.msra.mxu0 0.0
    %830 = vmatprep.subr.mxu0 0.0
    %831 = vmatpush1.msra.mxu0 0.0
    %832 = vmatprep.subr.mxu0 0.0
    %833 = vmatpush1.msra.mxu0 0.0
    %834 = vmatprep.subr.mxu0 0.0
    %835 = vmatpush1.msra.mxu0 0.0
    %836 = vmatprep.subr.mxu0 0.0
    %837 = vmatpush1.msra.mxu0 0.0
    %838 = vmatprep.subr.mxu0 0.0
    %839 = vmatpush1.msra.mxu0 0.0
    %840 = vmatprep.subr.mxu0 0.0
    %841 = vmatpush1.msra.mxu0 0.0
    %842 = vmatprep.subr.mxu0 0.0
    %843 = vmatpush1.msra.mxu0 0.0
    %844 = vmatprep.subr.mxu0 0.0
    %845 = vmatpush1.msra.mxu0 0.0
    %846 = vmatprep.subr.mxu0 0.0
    %847 = vmatpush1.msra.mxu0 0.0
    %848 = vmatprep.subr.mxu0 0.0
    %849 = vmatpush1.msra.mxu0 0.0
    %850 = vmatprep.subr.mxu0 0.0
    %851 = vmatpush1.msra.mxu0 0.0
    %852 = vmatprep.subr.mxu0 0.0
    %853 = vmatpush1.msra.mxu0 0.0
    %854 = vmatprep.subr.mxu0 0.0
    %855 = vmatpush1.msra.mxu0 0.0
    %856 = vmatprep.subr.mxu0 0.0
    %857 = vmatpush1.msra.mxu0 0.0
    %858 = vmatprep.subr.mxu0 0.0
    %859 = vmatpush1.msra.mxu0 0.0
    %860 = vmatprep.subr.mxu0 0.0
    %861 = vmatpush1.msra.mxu0 0.0
    %862 = vmatprep.subr.mxu0 0.0
    %863 = vmatpush1.msra.mxu0 0.0
    %864 = vmatprep.subr.mxu0 0.0
    %865 = vmatpush1.msra.mxu0 0.0
    %866 = vmatprep.subr.mxu0 0.0
    %867 = vmatpush1.msra.mxu0 0.0
    %868 = vmatprep.subr.mxu0 0.0
    %869 = vmatpush1.msra.mxu0 0.0
    %870 = vmatprep.subr.mxu0 0.0
    %871 = vmatpush1.msra.mxu0 0.0
    %872 = vmatprep.subr.mxu0 0.0
    %873 = vmatpush1.msra.mxu0 0.0
    %874 = vmatprep.subr.mxu0 0.0
    %875 = vmatpush1.msra.mxu0 0.0
    %876 = vmatprep.subr.mxu0 0.0
    %877 = vmatpush1.msra.mxu0 0.0
    %878 = vmatprep.mubr.f32.mxu0 0.0
    %879 = vmatmul.mubr.f32.gmra.mrb[0].mxu0 %v812
    %v880 = vpop.f32.mrb[0].mxu0
    %v881 = vadd.f32 0.0, %v880
    %v882 = vpop.f32.mrb[0].mxu0
    %883 = vdwg.mxu0
    %v884 = vadd.f32 %v193, %v881
    %v885 = vmul.f32 %v884, 0.5
    %v886 = vsel %vm211, %v884, %v885
    %v887 = vtanh.pop %v886
    %v888 = vmul.f32 %v887, 0.5
    %v889 = vadd.f32 %v888, 0.5
    %v890 = vsel %vm211, %v887, %v889
    %v891 = vmul.f32 %v890, %v802
    %893 = vrot.lane.b32.xlu0 %v890, 64
    %v894 = vpop.permute.xlu0 %893
    %v896 = vmul.f32 %v890, %v894
    %898 = vrot.lane.b32.xlu0 %v896, 32
    %v899 = vpop.permute.xlu0 %898
    %v901 = vadd.f32 %v891, %v899
    %v902 = vtanh.pop %v901
    %904 = vrot.lane.b32.xlu0 %v902, 64
    %v905 = vpop.permute.xlu0 %904
    %v907 = vmul.f32 %v890, %v905
    %909 = vrot.lane.b32.xlu0 %v907, 32
    %v910 = vpop.permute.xlu0 %909
    %v911 = vsel %vm212, %v910, 0
    %913 = vmatprep.subr.mxu0 0.0
    %914 = vmatpush1.msra.mxu0 %v201
    %915 = vmatprep.subr.mxu0 0.0
    %916 = vmatpush1.msra.mxu0 %v202
    %917 = vmatprep.subr.mxu0 0.0
    %918 = vmatpush1.msra.mxu0 %v203
    %919 = vmatprep.subr.mxu0 0.0
    %920 = vmatpush1.msra.mxu0 %v204
    %921 = vmatprep.subr.mxu0 0.0
    %922 = vmatpush1.msra.mxu0 0.0
    %923 = vmatprep.subr.mxu0 0.0
    %924 = vmatpush1.msra.mxu0 0.0
    %925 = vmatprep.subr.mxu0 0.0
    %926 = vmatpush1.msra.mxu0 0.0
    %927 = vmatprep.subr.mxu0 0.0
    %928 = vmatpush1.msra.mxu0 0.0
    %929 = vmatprep.subr.mxu0 0.0
    %930 = vmatpush1.msra.mxu0 0.0
    %931 = vmatprep.subr.mxu0 0.0
    %932 = vmatpush1.msra.mxu0 0.0
    %933 = vmatprep.subr.mxu0 0.0
    %934 = vmatpush1.msra.mxu0 0.0
    %935 = vmatprep.subr.mxu0 0.0
    %936 = vmatpush1.msra.mxu0 0.0
    %937 = vmatprep.subr.mxu0 0.0
    %938 = vmatpush1.msra.mxu0 0.0
    %939 = vmatprep.subr.mxu0 0.0
    %940 = vmatpush1.msra.mxu0 0.0
    %941 = vmatprep.subr.mxu0 0.0
    %942 = vmatpush1.msra.mxu0 0.0
    %943 = vmatprep.subr.mxu0 0.0
    %944 = vmatpush1.msra.mxu0 0.0
    %945 = vmatprep.subr.mxu0 0.0
    %946 = vmatpush1.msra.mxu0 0.0
    %947 = vmatprep.subr.mxu0 0.0
    %948 = vmatpush1.msra.mxu0 0.0
    %949 = vmatprep.subr.mxu0 0.0
    %950 = vmatpush1.msra.mxu0 0.0
    %951 = vmatprep.subr.mxu0 0.0
    %952 = vmatpush1.msra.mxu0 0.0
    %953 = vmatprep.subr.mxu0 0.0
    %954 = vmatpush1.msra.mxu0 0.0
    %955 = vmatprep.subr.mxu0 0.0
    %956 = vmatpush1.msra.mxu0 0.0
    %957 = vmatprep.subr.mxu0 0.0
    %958 = vmatpush1.msra.mxu0 0.0
    %959 = vmatprep.subr.mxu0 0.0
    %960 = vmatpush1.msra.mxu0 0.0
    %961 = vmatprep.subr.mxu0 0.0
    %962 = vmatpush1.msra.mxu0 0.0
    %963 = vmatprep.subr.mxu0 0.0
    %964 = vmatpush1.msra.mxu0 0.0
    %965 = vmatprep.subr.mxu0 0.0
    %966 = vmatpush1.msra.mxu0 0.0
    %967 = vmatprep.subr.mxu0 0.0
    %968 = vmatpush1.msra.mxu0 0.0
    %969 = vmatprep.subr.mxu0 0.0
    %970 = vmatpush1.msra.mxu0 0.0
    %971 = vmatprep.subr.mxu0 0.0
    %972 = vmatpush1.msra.mxu0 0.0
    %973 = vmatprep.subr.mxu0 0.0
    %974 = vmatpush1.msra.mxu0 0.0
    %975 = vmatprep.subr.mxu0 0.0
    %976 = vmatpush1.msra.mxu0 0.0
    %977 = vmatprep.mubr.f32.mxu0 0.0
    %978 = vmatmul.mubr.f32.gmra.mrb[0].mxu0 %v911
    %v979 = vpop.f32.mrb[0].mxu0
    %v980 = vadd.f32 0.0, %v979
    %v981 = vpop.f32.mrb[0].mxu0
    %982 = vdwg.mxu0
    %v983 = vadd.f32 %v198, %v980
    %v984 = vmul.f32 %v983, 0.5
    %v985 = vsel %vm211, %v983, %v984
    %v986 = vtanh.pop %v985
    %v987 = vmul.f32 %v986, 0.5
    %v988 = vadd.f32 %v987, 0.5
    %v989 = vsel %vm211, %v986, %v988
    %v990 = vmul.f32 %v989, %v901
    %992 = vrot.lane.b32.xlu0 %v989, 64
    %v993 = vpop.permute.xlu0 %992
    %v995 = vmul.f32 %v989, %v993
    %997 = vrot.lane.b32.xlu0 %v995, 32
    %v998 = vpop.permute.xlu0 %997
    %v1000 = vadd.f32 %v990, %v998
    %v1001 = vtanh.pop %v1000
    %1003 = vrot.lane.b32.xlu0 %v1001, 64
    %v1004 = vpop.permute.xlu0 %1003
    %v1006 = vmul.f32 %v989, %v1004
    %v1007 = vld [vmem:[%s6] sm:$0xff]
    %v1008 = vld [vmem:[%s6 + $0x8] sm:$0xff]
    %v1009 = vld [vmem:[%s6 + $0x10] sm:$0xff]
    %v1010 = vld [vmem:[%s6 + $0x18] sm:$0xff]
    %v1011 = vld [vmem:[%s7] sm:$0x1]
    %v1013 = vlaneseq
    %v1014 = vshrl.u32 %v1013, 7
    %v1015 = vsub.s32 0, %v1014
    %v1016 = vrot.slane %v1011, %v1015
    %1019 = vrot.lane.b32.xlu0 %v1006, 32
    %v1020 = vpop.permute.xlu0 %1019
    %v1021 = vsel %vm212, %v1020, 0
    %1023 = vmatprep.subr.mxu0 0.0
    %1024 = vmatpush1.msra.mxu0 %v1007
    %1025 = vmatprep.subr.mxu0 0.0
    %1026 = vmatpush1.msra.mxu0 %v1008
    %1027 = vmatprep.subr.mxu0 0.0
    %1028 = vmatpush1.msra.mxu0 %v1009
    %1029 = vmatprep.subr.mxu0 0.0
    %1030 = vmatpush1.msra.mxu0 %v1010
    %1031 = vmatprep.subr.mxu0 0.0
    %1032 = vmatpush1.msra.mxu0 0.0
    %1033 = vmatprep.subr.mxu0 0.0
    %1034 = vmatpush1.msra.mxu0 0.0
    %1035 = vmatprep.subr.mxu0 0.0
    %1036 = vmatpush1.msra.mxu0 0.0
    %1037 = vmatprep.subr.mxu0 0.0
    %1038 = vmatpush1.msra.mxu0 0.0
    %1039 = vmatprep.subr.mxu0 0.0
    %1040 = vmatpush1.msra.mxu0 0.0
    %1041 = vmatprep.subr.mxu0 0.0
    %1042 = vmatpush1.msra.mxu0 0.0
    %1043 = vmatprep.subr.mxu0 0.0
    %1044 = vmatpush1.msra.mxu0 0.0
    %1045 = vmatprep.subr.mxu0 0.0
    %1046 = vmatpush1.msra.mxu0 0.0
    %1047 = vmatprep.subr.mxu0 0.0
    %1048 = vmatpush1.msra.mxu0 0.0
    %1049 = vmatprep.subr.mxu0 0.0
    %1050 = vmatpush1.msra.mxu0 0.0
    %1051 = vmatprep.subr.mxu0 0.0
    %1052 = vmatpush1.msra.mxu0 0.0
    %1053 = vmatprep.subr.mxu0 0.0
    %1054 = vmatpush1.msra.mxu0 0.0
    %1055 = vmatprep.subr.mxu0 0.0
    %1056 = vmatpush1.msra.mxu0 0.0
    %1057 = vmatprep.subr.mxu0 0.0
    %1058 = vmatpush1.msra.mxu0 0.0
    %1059 = vmatprep.subr.mxu0 0.0
    %1060 = vmatpush1.msra.mxu0 0.0
    %1061 = vmatprep.subr.mxu0 0.0
    %1062 = vmatpush1.msra.mxu0 0.0
    %1063 = vmatprep.subr.mxu0 0.0
    %1064 = vmatpush1.msra.mxu0 0.0
    %1065 = vmatprep.subr.mxu0 0.0
    %1066 = vmatpush1.msra.mxu0 0.0
    %1067 = vmatprep.subr.mxu0 0.0
    %1068 = vmatpush1.msra.mxu0 0.0
    %1069 = vmatprep.subr.mxu0 0.0
    %1070 = vmatpush1.msra.mxu0 0.0
    %1071 = vmatprep.subr.mxu0 0.0
    %1072 = vmatpush1.msra.mxu0 0.0
    %1073 = vmatprep.subr.mxu0 0.0
    %1074 = vmatpush1.msra.mxu0 0.0
    %1075 = vmatprep.subr.mxu0 0.0
    %1076 = vmatpush1.msra.mxu0 0.0
    %1077 = vmatprep.subr.mxu0 0.0
    %1078 = vmatpush1.msra.mxu0 0.0
    %1079 = vmatprep.subr.mxu0 0.0
    %1080 = vmatpush1.msra.mxu0 0.0
    %1081 = vmatprep.subr.mxu0 0.0
    %1082 = vmatpush1.msra.mxu0 0.0
    %1083 = vmatprep.subr.mxu0 0.0
    %1084 = vmatpush1.msra.mxu0 0.0
    %1085 = vmatprep.subr.mxu0 0.0
    %1086 = vmatpush1.msra.mxu0 0.0
    %1087 = vmatprep.mubr.f32.mxu0 0.0
    %1088 = vmatmul.mubr.f32.gmra.mrb[0].mxu0 %v317
    %v1089 = vpop.f32.mrb[0].mxu0
    %v1090 = vadd.f32 %v1016, %v1089
    %v1091 = vpop.f32.mrb[0].mxu0
    %1092 = vmatprep.mubr.f32.mxu0 0.0
    %1093 = vmatmul.mubr.f32.gmra.mrb[0].mxu0 %v416
    %v1094 = vpop.f32.mrb[0].mxu0
    %v1095 = vadd.f32 %v1016, %v1094
    %v1096 = vpop.f32.mrb[0].mxu0
    %1097 = vmatprep.mubr.f32.mxu0 0.0
    %1098 = vmatmul.mubr.f32.gmra.mrb[0].mxu0 %v515
    %v1099 = vpop.f32.mrb[0].mxu0
    %v1100 = vadd.f32 %v1016, %v1099
    %v1101 = vpop.f32.mrb[0].mxu0
    %1102 = vmatprep.mubr.f32.mxu0 0.0
    %1103 = vmatmul.mubr.f32.gmra.mrb[0].mxu0 %v614
    %v1104 = vpop.f32.mrb[0].mxu0
    %v1105 = vadd.f32 %v1016, %v1104
    %v1106 = vpop.f32.mrb[0].mxu0
    %1107 = vmatprep.mubr.f32.mxu0 0.0
    %1108 = vmatmul.mubr.f32.gmra.mrb[0].mxu0 %v713
    %v1109 = vpop.f32.mrb[0].mxu0
    %v1110 = vadd.f32 %v1016, %v1109
    %v1111 = vpop.f32.mrb[0].mxu0
    %1112 = vmatprep.mubr.f32.mxu0 0.0
    %1113 = vmatmul.mubr.f32.gmra.mrb[0].mxu0 %v812
    %v1114 = vpop.f32.mrb[0].mxu0
    %v1115 = vadd.f32 %v1016, %v1114
    %v1116 = vpop.f32.mrb[0].mxu0
    %1117 = vmatprep.mubr.f32.mxu0 0.0
    %1118 = vmatmul.mubr.f32.gmra.mrb[0].mxu0 %v911
    %v1119 = vpop.f32.mrb[0].mxu0
    %v1120 = vadd.f32 %v1016, %v1119
    %v1121 = vpop.f32.mrb[0].mxu0
    %1122 = vmatprep.mubr.f32.mxu0 0.0
    %1123 = vmatmul.mubr.f32.gmra.mrb[0].mxu0 %v1021
    %v1124 = vpop.f32.mrb[0].mxu0
    %v1125 = vadd.f32 %v1016, %v1124
    %v1126 = vpop.f32.mrb[0].mxu0
    %1127 = vdwg.mxu0
    %1128 = vst [vmem:[#allocation7] sm:$0xff] %v1090
    %1129 = vst [vmem:[#allocation7 + $0x8] sm:$0xff] %v1095
    %1130 = vst [vmem:[#allocation7 + $0x10] sm:$0xff] %v1100
    %1131 = vst [vmem:[#allocation7 + $0x18] sm:$0xff] %v1105
    %1132 = vst [vmem:[#allocation7 + $0x20] sm:$0xff] %v1110
    %1133 = vst [vmem:[#allocation7 + $0x28] sm:$0xff] %v1115
    %1134 = vst [vmem:[#allocation7 + $0x30] sm:$0xff] %v1120
    %1135 = vst [vmem:[#allocation7 + $0x38] sm:$0xff] %v1125
    // Predicated region
    $region42: #{tpu_custom_call.1} parent=1 // pred_check
      _
    $region43: #{tpu_custom_call.1} parent=1 // pred_check_branch
      %1137 = sbr.rel (0) target = $region45
    $region44: #{tpu_custom_call.1} parent=1 // pred_region
      %s1139 = ssub.s32 1024, 1024
      %1140 = vsyncadd [#allocation4], %s1139
      %s1141 = sshll.u32 [#allocation7], 4
      %s1142 = int_to_ptr.vmem [resolvable:$true] %s1141
      %1147 = dma.vmem_to_hbm [thread:$0]  %s1142, 1024, %s8, [#allocation4], 128, 128, 8
    $region45: #{tpu_custom_call.1} parent=1 // pred_fallthru
      _
    // Predicated region
    $region46: #{tpu_custom_call.1} parent=1 // pred_check
      _
    $region47: #{tpu_custom_call.1} parent=1 // pred_check_branch
      %1149 = sbr.rel (0) target = $region49
    $region48: #{tpu_custom_call.1} parent=1 // pred_region
      %1150 = dma.done [#allocation4], 1024
    $region49: #{tpu_custom_call.1} parent=1 // pred_fallthru
      _
    %1151 = vsyncpa [#allocation3], 1
    %1152 = vsyncpa [#allocation6], 1
    %1153 = vsyncpa [#allocation4], 1

</llo_original>
